<compile_context>
chip_gen: v6e
topology: v6e:2x2x1
jax: 0.10.0
libtpu: 0.0.40
codegen_flags: <defaults>
</compile_context>

<pallas_src>
import math
import functools

import jax
import jax.numpy as jnp
from jax.experimental import pallas as pl
from jax.experimental.pallas import tpu as pltpu

LANES = 128
_LOG2 = math.log(2.0)
# ~1 MiB per input block: f32 -> 2048 rows, bf16 -> 4096 rows.
_BLOCK_BYTES = 1 << 20


def _sublane_multiple(dtype):
    itemsize = jnp.dtype(dtype).itemsize
    return {4: 8, 2: 16, 1: 32}.get(itemsize, 8)


def _logcosh_vals(x_f32):
    # x + softplus(-2x) - log 2  ==  |x| + log1p(exp(-2|x|)) - log 2  (exact).
    a = jnp.abs(x_f32)
    return a + jnp.log1p(jnp.exp(-2.0 * a)) - _LOG2


def _logcosh_kernel(pred_ref, true_ref, out_ref, acc_ref, *,
                    rows_valid, tr, blocks_per_shard, mask_needed):
    i = pl.program_id(1)  # block index within this shard

    @pl.when(i == 0)
    def _():
        acc_ref[...] = jnp.zeros_like(acc_ref)

    x = pred_ref[...].astype(jnp.float32) - true_ref[...].astype(jnp.float32)
    val = _logcosh_vals(x)

    def _accum(v):
        # (tr,128) -> (tr/8, 8, 128), reduce leading axis: pure VPU adds.
        # The single cross-lane/sublane reduction happens once per shard below.
        acc_ref[...] += jnp.sum(v.reshape(tr // 8, 8, LANES), axis=0)

    if mask_needed:
        # Logical (unclamped) global block index.  Blocks whose row range runs
        # past rows_valid are either the ragged last block or clamped duplicate
        # blocks (index_map keeps their DMA in-bounds); mask those rows.
        g = pl.program_id(0) * blocks_per_shard + i
        needs_mask = (g + 1) * tr > rows_valid

        @pl.when(jnp.logical_not(needs_mask))
        def _():
            _accum(val)

        @pl.when(needs_mask)
        def _():
            # Mask on the row index only (no flattened row*128+lane product ->
            # no int32 overflow).  Use jnp.where, not a multiply: rows beyond
            # rows_valid may hold stale VMEM producing NaN/Inf.
            row = jax.lax.broadcasted_iota(jnp.int32, val.shape, 0) + g * tr
            _accum(jnp.where(row < rows_valid, val, 0.0))
    else:
        _accum(val)

    @pl.when(i == pl.num_programs(1) - 1)
    def _():
        out_ref[...] = jnp.sum(acc_ref[...]).reshape(1, 1)


def _num_tensorcores():
    # 2 on v7x-style megacore chips, 1 on v5e/v6e.  Conservative fallback: 1.
    try:
        return max(1, int(getattr(jax.devices()[0], "num_cores", 1)))
    except Exception:
        return 1


def log_cosh_loss(y_pred, y_true):
    """Pallas implementation of LogCoshLoss.forward.  Returns a scalar f32."""
    assert y_pred.shape == y_true.shape
    n = y_pred.size
    assert n > 0

    pred = jnp.ravel(y_pred)
    true = jnp.ravel(y_true)

    sub = max(_sublane_multiple(pred.dtype), _sublane_multiple(true.dtype))
    chunk = sub * LANES                 # smallest legal 2-D tile, in elements
    n_main = (n // chunk) * chunk       # aligned prefix streamed by the kernel
    n_tail = n - n_main                 # < sub*128 ragged tail, wrapper-side

    total = jnp.float32(0.0)

    if n_main > 0:
        rows = n_main // LANES
        if n_main == n:
            pred2d = pred.reshape(rows, LANES)
            true2d = true.reshape(rows, LANES)
        else:
            # Prefix slice instead of a full padded copy of both inputs.
            pred2d = pred[:n_main].reshape(rows, LANES)
            true2d = true[:n_main].reshape(rows, LANES)

        itemsize = jnp.dtype(pred.dtype).itemsize
        tr_target = max(sub, (_BLOCK_BYTES // (LANES * itemsize)) // sub * sub)
        tr = max(sub, (min(tr_target, rows) // sub) * sub)

        total_blocks = pl.cdiv(rows, tr)
        num_shards = 2 if (_num_tensorcores() >= 2 and total_blocks >= 2) else 1
        blocks_per_shard = pl.cdiv(total_blocks, num_shards)
        mask_needed = (rows % tr != 0) or (num_shards * blocks_per_shard != total_blocks)

        def in_map(c, i):
            # Clamp so duplicate / ragged logical blocks DMA in-bounds data;
            # the kernel masks their contribution to exactly zero.
            return (jnp.minimum(c * blocks_per_shard + i, total_blocks - 1), 0)

        kernel = functools.partial(
            _logcosh_kernel, rows_valid=rows, tr=tr,
            blocks_per_shard=blocks_per_shard, mask_needed=mask_needed)

        def run(dim_sem):
            return pl.pallas_call(
                kernel,
                out_shape=jax.ShapeDtypeStruct((num_shards, 1), jnp.float32),
                grid_spec=pltpu.PrefetchScalarGridSpec(
                    num_scalar_prefetch=0,
                    grid=(num_shards, blocks_per_shard),
                    in_specs=[
                        pl.BlockSpec((tr, LANES), in_map),
                        pl.BlockSpec((tr, LANES), in_map),
                    ],
                    out_specs=pl.BlockSpec((1, 1), lambda c, i: (c, 0)),
                    scratch_shapes=[pltpu.VMEM((8, LANES), jnp.float32)],
                ),
                compiler_params=pltpu.CompilerParams(dimension_semantics=dim_sem),
            )(pred2d, true2d)

        if num_shards >= 2:
            # Only CORE_PARALLEL actually maps the shard axis onto both
            # TensorCores (v7x); plain "parallel" barely changes codegen.
            try:
                partials = run((pltpu.CORE_PARALLEL, pltpu.ARBITRARY))
            except Exception:
                partials = run(("parallel", "arbitrary"))
        else:
            partials = run(("arbitrary", "arbitrary"))

        total = total + jnp.sum(partials)

    if n_tail > 0:
        x_tail = pred[n_main:].astype(jnp.float32) - true[n_main:].astype(jnp.float32)
        total = total + jnp.sum(_logcosh_vals(x_tail))

    return total / jnp.float32(n)


def _reference(y_pred, y_true):
    x = (y_pred - y_true).astype(jnp.float32)
    return jnp.mean(x + jax.nn.softplus(-2.0 * x) - _LOG2)


if __name__ == "__main__":
    key = jax.random.PRNGKey(0)

    def _check(shape, k):
        k1, k2 = jax.random.split(k)
        y_pred = jax.random.normal(k1, shape, dtype=jnp.float32)
        y_true = jax.random.normal(k2, shape, dtype=jnp.float32)
        loss = jax.block_until_ready(log_cosh_loss(y_pred, y_true))
        ref = jax.block_until_ready(_reference(y_pred, y_true))
        assert jnp.allclose(loss, ref, atol=1e-5, rtol=1e-5), (
            shape, float(loss), float(ref))

    keys = jax.random.split(key, 5)
    _check((2, 4, 16, 16), keys[0])   # primary: 128-aligned, single block
    _check((3, 5, 7), keys[1])        # tiny: all-tail path (no aligned prefix)
    _check((17, 64, 128), keys[2])    # aligned multi-row, single block
    _check((5, 300, 77), keys[3])     # kernel prefix + ragged wrapper tail
    _check((2500, 128), keys[4])      # multi-block with masked ragged last block

    print("KERNEL_OK")
</pallas_src>

<mosaic_0001>
module attributes {stable_mosaic.version = 11 : i64} {
  func.func @_logcosh_kernel(%arg0: i32, %arg1: i32, %arg2: memref<16x128xf32, #tpu.memory_space<vmem>>, %arg3: memref<16x128xf32, #tpu.memory_space<vmem>>, %arg4: memref<1x1xf32, #tpu.memory_space<vmem>>, %arg5: memref<8x128xf32, #tpu.memory_space<vmem>>) attributes {dimension_semantics = [#tpu.dimension_semantics<arbitrary>, #tpu.dimension_semantics<arbitrary>], iteration_bounds = array<i64: 1, 1>, scalar_prefetch = 0 : i64, scratch_operands = 1 : i64, tpu.core_type = #tpu.core_type<tc>, window_params = [{transform_indices = @transform_0, window_bounds = array<i64: 16, 128>}, {transform_indices = @transform_1, window_bounds = array<i64: 16, 128>}, {transform_indices = @transform_2, window_bounds = array<i64: 1, 1>}]} {
    %c0_i32 = arith.constant 0 : i32
    %0 = arith.cmpi eq, %arg1, %c0_i32 : i32
    %1 = arith.extui %0 : i1 to i32
    %c0_i32_0 = arith.constant 0 : i32
    %2 = arith.cmpi ne, %1, %c0_i32_0 : i32
    scf.if %2 {
      %cst_12 = arith.constant 0.000000e+00 : f32
      %22 = vector.broadcast %cst_12 : f32 to vector<8x128xf32>
      %c0_13 = arith.constant 0 : index
      %c0_14 = arith.constant 0 : index
      %23 = vector.load %arg5[%c0_13, %c0_14] : memref<8x128xf32, #tpu.memory_space<vmem>>, vector<8x128xf32>
      tpu.vector_store %arg5[%c0_13, %c0_14], %22 {strides = array<i32>} : memref<8x128xf32, #tpu.memory_space<vmem>>, vector<8x128xf32>,
    } else {
    }
    %c0 = arith.constant 0 : index
    %c0_1 = arith.constant 0 : index
    %3 = vector.load %arg2[%c0, %c0_1] : memref<16x128xf32, #tpu.memory_space<vmem>>, vector<16x128xf32>
    %c0_2 = arith.constant 0 : index
    %c0_3 = arith.constant 0 : index
    %4 = vector.load %arg3[%c0_2, %c0_3] : memref<16x128xf32, #tpu.memory_space<vmem>>, vector<16x128xf32>
    %5 = arith.subf %3, %4 : vector<16x128xf32>
    %6 = math.absf %5 : vector<16x128xf32>
    %cst = arith.constant -2.000000e+00 : f32
    %7 = vector.broadcast %cst : f32 to vector<16x128xf32>
    %8 = arith.mulf %7, %6 : vector<16x128xf32>
    %9 = math.exp %8 : vector<16x128xf32>
    %10 = math.log1p %9 : vector<16x128xf32>
    %11 = arith.addf %6, %10 : vector<16x128xf32>
    %cst_4 = arith.constant 0.693147182 : f32
    %12 = vector.broadcast %cst_4 : f32 to vector<16x128xf32>
    %13 = arith.subf %11, %12 : vector<16x128xf32>
    %c0_5 = arith.constant 0 : index
    %c0_6 = arith.constant 0 : index
    %14 = vector.load %arg5[%c0_5, %c0_6] : memref<8x128xf32, #tpu.memory_space<vmem>>, vector<8x128xf32>
    %15 = vector.shape_cast %13 : vector<16x128xf32> to vector<2x8x128xf32>
    %cst_7 = arith.constant dense<0.000000e+00> : vector<8x128xf32>
    %16 = vector.multi_reduction <add>, %15, %cst_7 [0] : vector<2x8x128xf32> to vector<8x128xf32>
    %17 = arith.addf %14, %16 : vector<8x128xf32>
    %c0_8 = arith.constant 0 : index
    %c0_9 = arith.constant 0 : index
    %18 = vector.load %arg5[%c0_8, %c0_9] : memref<8x128xf32, #tpu.memory_space<vmem>>, vector<8x128xf32>
    tpu.vector_store %arg5[%c0_8, %c0_9], %17 {strides = array<i32>} : memref<8x128xf32, #tpu.memory_space<vmem>>, vector<8x128xf32>,
    %c0_i32_10 = arith.constant 0 : i32
    %19 = arith.cmpi eq, %arg1, %c0_i32_10 : i32
    %20 = arith.extui %19 : i1 to i32
    %c0_i32_11 = arith.constant 0 : i32
    %21 = arith.cmpi ne, %20, %c0_i32_11 : i32
    scf.if %21 {
      %c0_12 = arith.constant 0 : index
      %c0_13 = arith.constant 0 : index
      %22 = vector.load %arg5[%c0_12, %c0_13] : memref<8x128xf32, #tpu.memory_space<vmem>>, vector<8x128xf32>
      %23 = vector.shape_cast %22 : vector<8x128xf32> to vector<1x8x128xf32>
      %cst_14 = arith.constant dense<0.000000e+00> : vector<1xf32>
      %24 = vector.multi_reduction <add>, %23, %cst_14 [1, 2] : vector<1x8x128xf32> to vector<1xf32>
      %25 = vector.shape_cast %24 : vector<1xf32> to vector<1x1x1xf32>
      %26 = vector.extract %25[0, 0, 0] : f32 from vector<1x1x1xf32>
      %27 = vector.broadcast %26 : f32 to vector<1x1xf32>
      %c0_15 = arith.constant 0 : index
      %c0_16 = arith.constant 0 : index
      %28 = vector.load %arg4[%c0_15, %c0_16] : memref<1x1xf32, #tpu.memory_space<vmem>>, vector<1x1xf32>
      tpu.vector_store %arg4[%c0_15, %c0_16], %27 {strides = array<i32>} : memref<1x1xf32, #tpu.memory_space<vmem>>, vector<1x1xf32>,
    } else {
    }
    return
  }
  func.func @transform_0(%arg0: i32, %arg1: i32) -> (i32, i32) {
    %c1_i32 = arith.constant 1 : i32
    %0 = arith.muli %arg0, %c1_i32 : i32
    %1 = arith.addi %0, %arg1 : i32
    %c0_i32 = arith.constant 0 : i32
    %2 = arith.minsi %1, %c0_i32 : i32
    %c0_i32_0 = arith.constant 0 : i32
    %c0_i32_1 = arith.constant 0 : i32
    return %2, %c0_i32_0 : i32, i32
  }
  func.func @transform_1(%arg0: i32, %arg1: i32) -> (i32, i32) {
    %c1_i32 = arith.constant 1 : i32
    %0 = arith.muli %arg0, %c1_i32 : i32
    %1 = arith.addi %0, %arg1 : i32
    %c0_i32 = arith.constant 0 : i32
    %2 = arith.minsi %1, %c0_i32 : i32
    %c0_i32_0 = arith.constant 0 : i32
    %c0_i32_1 = arith.constant 0 : i32
    return %2, %c0_i32_0 : i32, i32
  }
  func.func @transform_2(%arg0: i32, %arg1: i32) -> (i32, i32) {
    %c0_i32 = arith.constant 0 : i32
    %c0_i32_0 = arith.constant 0 : i32
    return %arg0, %c0_i32 : i32, i32
  }
}

</mosaic_0001>

<llo_original>
// kernel: tpu_custom_call.1
$region0: #{tpu_custom_call.1}
  #allocation0 [shape = 'u32[]', space=smem, size = 0x4, offset = 0x4, fixed_abs, tag = 'smem constant byte address 0x4 - core index']
  #allocation1 [shape = 'u32[144,128]{1,0:T(1,128)}', space=vmem, size = 0x12000, scoped, tag = 'internal scratch']
  #allocation2 [shape = 'f32[8,128]{1,0:T(8,128)}', space=vmem, size = 0x1000, scoped, tag = 'scratch operand']
  %s0 = inlined_call_operand.hbm [shape: f32[16,128], index: 0, kind: input, shape index: {}]
  %s1 = inlined_call_operand.hbm [shape: f32[16,128], index: 1, kind: input, shape index: {}]
  %s2 = inlined_call_operand.hbm [shape: f32[1,1], index: 2, kind: output, shape index: {}]
  %s3 = sld [smem:[#allocation0]]
  $region34: #{tpu_custom_call.1} parent=0
    _
  %s5 = ssub.s32 1, %s3
  %s6 = scalar_select 0, %s5, %s3
  $region1: #{tpu_custom_call.1} parent=0
    #allocation3 [shape = 'u8[8192]{0}', space=vmem, size = 0x2000, scoped, tag = 'input window, operand 0, single buffered']
    #allocation4 [shape = 's32[1]{0}', space=sflag, size = 0x4, scoped, tag = 'scoped memory for tpu_custom_call.1']
    #allocation5 [shape = 's32[1]{0}', space=sflag, size = 0x4, scoped, tag = 'scoped memory for tpu_custom_call.1']
    #allocation6 [shape = 'u8[8192]{0}', space=vmem, size = 0x2000, scoped, tag = 'input window, operand 1, single buffered']
    #allocation7 [shape = 's32[1]{0}', space=sflag, size = 0x4, scoped, tag = 'scoped memory for tpu_custom_call.1']
    #allocation8 [shape = 'u8[512]{0}', space=vmem, size = 0x400, scoped, tag = 'output window, operand 0, single buffered']
    %7 = vsyncpa [#allocation4], 0
    %8 = vsyncpa [#allocation7], 0
    %9 = vsyncpa [#allocation5], 0
    // Predicated region
    $region2: #{tpu_custom_call.1} parent=1 // pred_check
      _
    $region3: #{tpu_custom_call.1} parent=1 // pred_check_branch
      %11 = sbr.rel (0) target = $region5
    $region4: #{tpu_custom_call.1} parent=1 // pred_region
      %s12 = sadd.s32 0, 0
      %p13 = scmp.lt.s32.totalorder %s12, 0
      %s14 = scalar_select %p13, %s12, 0
      %s15 = smul.u32 2, %s14
      %s17 = ssub.s32 256, 256
      %18 = vsyncadd [#allocation4], %s17
      %s19 = smul.addr %s15, 128
      %s20 = scalar_lea.hbm %s0, %s19
      %s21 = sshll.u32 [#allocation3], 4
      %s22 = int_to_ptr.vmem [resolvable:$true] %s21
      %27 = dma.hbm_to_vmem [thread:$0]  %s20, 256, %s22, [#allocation4], 128, 128, 8
    $region5: #{tpu_custom_call.1} parent=1 // pred_fallthru
      _
    // Predicated region
    $region6: #{tpu_custom_call.1} parent=1 // pred_check
      _
    $region7: #{tpu_custom_call.1} parent=1 // pred_check_branch
      %29 = sbr.rel (0) target = $region9
    $region8: #{tpu_custom_call.1} parent=1 // pred_region
      %s30 = sadd.s32 0, 0
      %p31 = scmp.lt.s32.totalorder %s30, 0
      %s32 = scalar_select %p31, %s30, 0
      %s33 = smul.u32 2, %s32
      %s35 = ssub.s32 256, 256
      %36 = vsyncadd [#allocation7], %s35
      %s37 = smul.addr %s33, 128
      %s38 = scalar_lea.hbm %s1, %s37
      %s39 = sshll.u32 [#allocation6], 4
      %s40 = int_to_ptr.vmem [resolvable:$true] %s39
      %45 = dma.hbm_to_vmem [thread:$0]  %s38, 256, %s40, [#allocation7], 128, 128, 8
    $region9: #{tpu_custom_call.1} parent=1 // pred_fallthru
      _
    // Predicated region
    $region10: #{tpu_custom_call.1} parent=1 // pred_check
      _
    $region11: #{tpu_custom_call.1} parent=1 // pred_check_branch
      %47 = sbr.rel (0) target = $region13
    $region12: #{tpu_custom_call.1} parent=1 // pred_region
      %48 = dma.done [#allocation4], 256
    $region13: #{tpu_custom_call.1} parent=1 // pred_fallthru
      _
    // Predicated region
    $region14: #{tpu_custom_call.1} parent=1 // pred_check
      _
    $region15: #{tpu_custom_call.1} parent=1 // pred_check_branch
      %50 = sbr.rel (0) target = $region17
    $region16: #{tpu_custom_call.1} parent=1 // pred_region
      %51 = dma.done [#allocation7], 256
    $region17: #{tpu_custom_call.1} parent=1 // pred_fallthru
      _
    %s52 = sadd.s32 0, 0
    %p53 = scmp.lt.s32.totalorder %s52, 0
    %s54 = scalar_select %p53, %s52, 0
    %s55 = smul.u32 2, %s54
    %s56 = sadd.s32 0, 0
    %p57 = scmp.lt.s32.totalorder %s56, 0
    %s58 = scalar_select %p57, %s56, 0
    %s59 = smul.u32 2, %s58
    %p60 = scmp.eq.s32.totalorder 0, 0
    // Predicated region
    $region18: #{tpu_custom_call.1} parent=1 // pred_check
      %p61 = pneg %p60
    $region19: #{tpu_custom_call.1} parent=1 // pred_check_branch
      %63 = sbr.rel (%p61) target = $region21
    $region20: #{tpu_custom_call.1} parent=1 // pred_region
      %64 = vst [vmem:[#allocation2] sm:$0xff] 0.0
    $region21: #{tpu_custom_call.1} parent=1 // pred_fallthru
      _
    %v65 = vld [vmem:[#allocation3] sm:$0xff]
    %v66 = vld [vmem:[#allocation3 + $0x8] sm:$0xff]
    %v67 = vld [vmem:[#allocation6] sm:$0xff]
    %v68 = vld [vmem:[#allocation6 + $0x8] sm:$0xff]
    %v69 = vsub.f32 %v65, %v67
    %v70 = vsub.f32 %v66, %v68
    %v71 = vand.u32 2147483647, %v69
    %v72 = vand.u32 2147483647, %v70
    %v73 = vmul.f32 %v71, -2.0
    %v74 = vmul.f32 %v72, -2.0
    %v75 = vmul.f32 %v73, 1.442695
    %v76 = vpow.pop %v75
    %v77 = vmul.f32 %v74, 1.442695
    %v78 = vpow.pop %v77
    %v79 = vadd.f32 %v76, 1.0
    %v80 = vlog2.pop %v79
    %v81 = vmul.f32 %v80, 0.6931472
    %v82 = vmul.f32 -0.5, %v76
    %v83 = vadd.f32 %v82, 1.0
    %v84 = vmul.f32 %v83, %v76
    %v85 = vand.u32 2147483647, %v76
    %vm86 = vcmp.lt.f32.partialorder %v85, 0.0004427343
    %v87 = vsel %vm86, %v84, %v81
    %v88 = vadd.f32 %v78, 1.0
    %v89 = vlog2.pop %v88
    %v90 = vmul.f32 %v89, 0.6931472
    %v91 = vmul.f32 -0.5, %v78
    %v92 = vadd.f32 %v91, 1.0
    %v93 = vmul.f32 %v92, %v78
    %v94 = vand.u32 2147483647, %v78
    %vm95 = vcmp.lt.f32.partialorder %v94, 0.0004427343
    %v96 = vsel %vm95, %v93, %v90
    %v97 = vadd.f32 %v71, %v87
    %v98 = vadd.f32 %v72, %v96
    %v99 = vsub.f32 %v97, 0.6931472
    %v100 = vsub.f32 %v98, 0.6931472
    %v101 = vld [vmem:[#allocation2] sm:$0xff]
    %v102 = vadd.f32 %v99, %v100
    %v103 = vadd.f32 %v101, %v102
    %104 = vst [vmem:[#allocation2] sm:$0xff] %v103
    // Predicated region
    $region22: #{tpu_custom_call.1} parent=1 // pred_check
      %p105 = pneg %p60
    $region23: #{tpu_custom_call.1} parent=1 // pred_check_branch
      %107 = sbr.rel (%p105) target = $region25
    $region24: #{tpu_custom_call.1} parent=1 // pred_region
      %v108 = vld [vmem:[#allocation2] sm:$0xff]
      %109 = vadd.xlane.f32.xlu0 %v108
      %v110 = vpop.xlane.xlu0 %109
      %v111 = vrot.slane %v110, 4
      %v112 = vadd.f32 %v110, %v111
      %v113 = vrot.slane %v112, 2
      %v114 = vadd.f32 %v112, %v113
      %v115 = vrot.slane %v114, 1
      %v116 = vadd.f32 %v114, %v115
      %s117 = vtos %v116
      %v118 = vstv %s117
      %vm119 = vcmask 0
      %120 = vst.msk [vmem:[#allocation8] sm:$0x1] %vm119, %v118
    $region25: #{tpu_custom_call.1} parent=1 // pred_fallthru
      _
    // Predicated region
    $region26: #{tpu_custom_call.1} parent=1 // pred_check
      _
    $region27: #{tpu_custom_call.1} parent=1 // pred_check_branch
      %122 = sbr.rel (0) target = $region29
    $region28: #{tpu_custom_call.1} parent=1 // pred_region
      %s124 = ssub.s32 16, 16
      %125 = vsyncadd [#allocation5], %s124
      %s127 = sshll.u32 [#allocation8], 4
      %s128 = int_to_ptr.vmem [resolvable:$true] %s127
      %130 = dma.vmem_to_hbm [thread:$0]  %s128, 16, %s2, [#allocation5]
    $region29: #{tpu_custom_call.1} parent=1 // pred_fallthru
      _
    // Predicated region
    $region30: #{tpu_custom_call.1} parent=1 // pred_check
      _
    $region31: #{tpu_custom_call.1} parent=1 // pred_check_branch
      %132 = sbr.rel (0) target = $region33
    $region32: #{tpu_custom_call.1} parent=1 // pred_region
      %133 = dma.done [#allocation5], 16
    $region33: #{tpu_custom_call.1} parent=1 // pred_fallthru
      _
    %134 = vsyncpa [#allocation4], 1
    %135 = vsyncpa [#allocation7], 1
    %136 = vsyncpa [#allocation5], 1

</llo_original>
